<compile_context>
chip_gen: v5e
topology: v5e:2x2
jax: 0.10.0
libtpu: 0.0.40
codegen_flags: <defaults>
</compile_context>

<pallas_src>
import functools

import jax
import jax.numpy as jnp
from jax.experimental import pallas as pl
from jax.experimental.pallas import tpu as pltpu


def _round_up(x: int, m: int) -> int:
    return ((x + m - 1) // m) * m


def _fused_mlp_kernel(*refs, depth: int):
    # refs = (x_ref, w_0..w_{depth-1}, b_0..b_{depth-1}, o_ref)
    # x_ref  : (block_n, K0_pad)      f32 activations (rows->sublanes, feats->lanes)
    # w_l    : (K_l_pad, N_l_pad)     bf16 pre-transposed, zero-padded W.T
    # b_l    : (1, N_l_pad)           f32 zero-padded bias
    # o_ref  : (block_n, N_last_pad)  f32
    x_ref = refs[0]
    w_refs = refs[1:1 + depth]
    b_refs = refs[1 + depth:1 + 2 * depth]
    o_ref = refs[1 + 2 * depth]

    # Activations stay VMEM/vreg resident across the whole layer chain.
    h = x_ref[...].astype(jnp.bfloat16)          # bf16 MXU operand
    for l in range(depth):                        # static unroll (small, static depth)
        y = jnp.dot(h, w_refs[l][...], preferred_element_type=jnp.float32)
        y = y + b_refs[l][...]                    # f32 bias broadcast over rows
        if l != depth - 1:
            y = jnp.maximum(y, 0.0)               # ReLU (skipped on last layer)
            h = y.astype(jnp.bfloat16)            # bf16 carry into next MXU pass
        else:
            h = y
    o_ref[...] = h.astype(o_ref.dtype)


def init_ptdeep_params(config, key):
    """Deterministic N(0,1) init matching PTDeep.__init__ shapes (PyTorch layout)."""
    weights, biases = [], []
    for i in range(len(config) - 1):
        key, kw, kb = jax.random.split(key, 3)
        w = jax.random.normal(kw, (config[i + 1], config[i]), dtype=jnp.float32)
        b = jax.random.normal(kb, (config[i + 1],), dtype=jnp.float32)
        weights.append(w)
        biases.append(b)
    return weights, biases


def prepare_ptdeep_params(weights, biases):
    """One-time prep (NOT the hot path).

    Each W (D_out, D_in) is stored as W.T, zero-padded per layer to
    (round_up(D_in,128), round_up(D_out,128)), cast to bf16.  Each bias is
    zero-padded to (1, round_up(D_out,128)), kept f32.  Zero padding is
    mathematically inert: padded activation columns hit all-zero weight rows,
    padded output columns get zero bias (-> 0 after ReLU) and feed all-zero
    weight rows of the next layer.
    """
    depth = len(weights)
    dims = [weights[0].shape[1]] + [w.shape[0] for w in weights]
    wt_pad, b_pad = [], []
    for l in range(depth):
        d_out, d_in = weights[l].shape
        kp, np_ = _round_up(d_in, 128), _round_up(d_out, 128)
        wt = jnp.zeros((kp, np_), jnp.float32).at[:d_in, :d_out].set(
            jnp.transpose(weights[l]))
        wt_pad.append(wt.astype(jnp.bfloat16))
        b_pad.append(jnp.zeros((1, np_), jnp.float32).at[0, :d_out].set(biases[l]))
    return wt_pad, b_pad, dims[0], dims[-1]


@functools.partial(jax.jit,
                   static_argnames=("d_in", "d_out", "single_buffer_weights"))
def ptdeep_forward(x, wt_pad, b_pad, *, d_in: int, d_out: int,
                   single_buffer_weights: bool = True):
    """PTDeep.forward: X = (W @ X.T + b[:,None]).T == X @ W.T + b, ReLU after
    every layer except the last -- all in one fused Pallas kernel."""
    n = x.shape[0]
    depth = len(wt_pad)
    d_in_pad = wt_pad[0].shape[0]
    d_out_pad = wt_pad[-1].shape[1]

    # ---- row tiling ------------------------------------------------------
    if n <= 128:
        block_n = _round_up(max(n, 8), 8)
        n_pad = block_n
    elif n <= 1024:
        # >=2 row blocks so the "parallel" axis shards across both v7x TCs.
        block_n = _round_up(pl.cdiv(n, 2), 8)
        n_pad = 2 * block_n
    else:
        block_n = 512            # HBM-roofline-friendly tile for big batches
        n_pad = _round_up(n, block_n)
    grid = (n_pad // block_n,)

    # ---- pad input only to the FIRST layer's lane-aligned width -----------
    if n_pad == n and d_in_pad == d_in:
        xp = x
    else:
        xp = jnp.pad(x, ((0, n_pad - n), (0, d_in_pad - d_in)))

    # ---- BlockSpecs --------------------------------------------------------
    x_spec = pl.BlockSpec((block_n, d_in_pad), lambda i: (i, 0))
    if single_buffer_weights:
        # Constant-index weight/bias slabs: nothing to double-buffer.
        w_specs = [pl.BlockSpec(w.shape, lambda i: (0, 0),
                                pipeline_mode=pl.Buffered(1)) for w in wt_pad]
        b_specs = [pl.BlockSpec(b.shape, lambda i: (0, 0),
                                pipeline_mode=pl.Buffered(1)) for b in b_pad]
    else:
        w_specs = [pl.BlockSpec(w.shape, lambda i: (0, 0)) for w in wt_pad]
        b_specs = [pl.BlockSpec(b.shape, lambda i: (0, 0)) for b in b_pad]
    out_spec = pl.BlockSpec((block_n, d_out_pad), lambda i: (i, 0))

    # ---- VMEM budget + cost estimate ---------------------------------------
    w_bytes = sum(int(w.size) * 2 for w in wt_pad)        # bf16 weights
    b_bytes = sum(int(b.size) * 4 for b in b_pad)         # f32 biases
    wb_bufs = 1 if single_buffer_weights else 2
    io_bytes = 2 * block_n * d_in_pad * 4 + 2 * block_n * d_out_pad * 4
    needed = wb_bufs * (w_bytes + b_bytes) + io_bytes
    vmem_limit = int(min(max(2 * needed + (4 << 20), 16 << 20), 64 << 20))

    flops = 2 * n_pad * sum(w.shape[0] * w.shape[1] for w in wt_pad)
    bytes_accessed = (int(xp.size) * 4 + w_bytes + b_bytes
                      + n_pad * d_out_pad * 4)

    kernel = functools.partial(_fused_mlp_kernel, depth=depth)
    out = pl.pallas_call(
        kernel,
        out_shape=jax.ShapeDtypeStruct((n_pad, d_out_pad), jnp.float32),
        grid=grid,
        in_specs=[x_spec] + w_specs + b_specs,
        out_specs=out_spec,
        compiler_params=pltpu.CompilerParams(
            dimension_semantics=("parallel",),
            vmem_limit_bytes=vmem_limit),
        cost_estimate=pl.CostEstimate(
            flops=int(flops), transcendentals=0,
            bytes_accessed=int(bytes_accessed)),
    )(xp, *wt_pad, *b_pad)

    return out[:n, :d_out]


if __name__ == "__main__":
    key = jax.random.PRNGKey(0)

    # Small MLP: config = [16, 32, 32, 10], activation = ReLU, batch = 8.
    config = [16, 32, 32, 10]
    kx, kp = jax.random.split(key)
    x = jax.random.normal(kx, (8, config[0]), dtype=jnp.float32)
    weights, biases = init_ptdeep_params(config, kp)

    # One-time parameter prep (transpose + per-layer pad + bf16 cast).
    wt_pad, b_pad, d_in, d_out = prepare_ptdeep_params(weights, biases)

    def run(single_buffer):
        return jax.block_until_ready(
            ptdeep_forward(x, wt_pad, b_pad, d_in=d_in, d_out=d_out,
                           single_buffer_weights=single_buffer))

    try:
        out = run(True)
    except Exception:
        # Fall back to default double-buffering if single-buffer pipeline_mode
        # is unsupported on this jax build (perf knob only; math identical).
        out = run(False)

    # Reference #1: plain f32 JAX, same math as the PyTorch forward.
    ref32 = x
    for i in range(len(weights)):
        ref32 = ref32 @ weights[i].T + biases[i]
        if i != len(weights) - 1:
            ref32 = jnp.maximum(ref32, 0.0)

    # Reference #2: mimic the kernel's bf16 operands / f32 accumulation so the
    # tolerance can stay tight.
    refbf = x
    for i in range(len(weights)):
        refbf = jnp.dot(refbf.astype(jnp.bfloat16),
                        weights[i].T.astype(jnp.bfloat16),
                        preferred_element_type=jnp.float32) + biases[i]
        if i != len(weights) - 1:
            refbf = jnp.maximum(refbf, 0.0)

    assert out.shape == (8, config[-1])
    assert jnp.allclose(out, refbf, atol=5e-3, rtol=5e-3), "bf16-matched ref mismatch"
    assert jnp.allclose(out, ref32, atol=1.0, rtol=1e-1), "f32 ref mismatch"

    # TODO(synk): PTDeep.loss (softmax cross-entropy) is not part of forward();
    # intentionally not fused into the kernel.

    print("KERNEL_OK")
</pallas_src>

<mosaic_0001>
module attributes {stable_mosaic.version = 11 : i64} {
  func.func @_fused_mlp_kernel(%arg0: i32, %arg1: memref<8x128xf32, #tpu.memory_space<vmem>>, %arg2: memref<128x128xbf16, #tpu.memory_space<vmem>>, %arg3: memref<128x128xbf16, #tpu.memory_space<vmem>>, %arg4: memref<128x128xbf16, #tpu.memory_space<vmem>>, %arg5: memref<1x128xf32, #tpu.memory_space<vmem>>, %arg6: memref<1x128xf32, #tpu.memory_space<vmem>>, %arg7: memref<1x128xf32, #tpu.memory_space<vmem>>, %arg8: memref<8x128xf32, #tpu.memory_space<vmem>>) attributes {dimension_semantics = [#tpu.dimension_semantics<parallel>], iteration_bounds = array<i64: 1>, scalar_prefetch = 0 : i64, scratch_operands = 0 : i64, tpu.core_type = #tpu.core_type<tc>, window_params = [{transform_indices = @transform_0, window_bounds = array<i64: 8, 128>}, {pipeline_mode = #tpu.pipeline_mode<synchronous>, transform_indices = @transform_1, window_bounds = array<i64: 128, 128>}, {pipeline_mode = #tpu.pipeline_mode<synchronous>, transform_indices = @transform_2, window_bounds = array<i64: 128, 128>}, {pipeline_mode = #tpu.pipeline_mode<synchronous>, transform_indices = @transform_3, window_bounds = array<i64: 128, 128>}, {pipeline_mode = #tpu.pipeline_mode<synchronous>, transform_indices = @transform_4, window_bounds = array<i64: 1, 128>}, {pipeline_mode = #tpu.pipeline_mode<synchronous>, transform_indices = @transform_5, window_bounds = array<i64: 1, 128>}, {pipeline_mode = #tpu.pipeline_mode<synchronous>, transform_indices = @transform_6, window_bounds = array<i64: 1, 128>}, {transform_indices = @transform_7, window_bounds = array<i64: 8, 128>}]} {
    %c0 = arith.constant 0 : index
    %c0_0 = arith.constant 0 : index
    %0 = vector.load %arg1[%c0, %c0_0] : memref<8x128xf32, #tpu.memory_space<vmem>>, vector<8x128xf32>
    %1 = arith.truncf %0 : vector<8x128xf32> to vector<8x128xbf16>
    %c0_1 = arith.constant 0 : index
    %c0_2 = arith.constant 0 : index
    %2 = vector.load %arg2[%c0_1, %c0_2] : memref<128x128xbf16, #tpu.memory_space<vmem>>, vector<128x128xbf16>
    %cst = arith.constant dense<0.000000e+00> : vector<8x128xf32>
    %3 = tpu.matmul %1, %2, %cst {dimension_numbers = #tpu.dot_dimension_numbers<[1], [0], [0], [1], [0, 0, 1, 1], [], []>} : vector<8x128xbf16>, vector<128x128xbf16>, vector<8x128xf32> -> vector<8x128xf32>
    %c0_3 = arith.constant 0 : index
    %c0_4 = arith.constant 0 : index
    %4 = vector.load %arg5[%c0_3, %c0_4] : memref<1x128xf32, #tpu.memory_space<vmem>>, vector<1x128xf32>
    %5 = vector.broadcast %4 : vector<1x128xf32> to vector<8x128xf32>
    %6 = arith.addf %3, %5 : vector<8x128xf32>
    %cst_5 = arith.constant 0.000000e+00 : f32
    %7 = vector.broadcast %cst_5 : f32 to vector<8x128xf32>
    %8 = arith.maximumf %6, %7 : vector<8x128xf32>
    %9 = arith.truncf %8 : vector<8x128xf32> to vector<8x128xbf16>
    %c0_6 = arith.constant 0 : index
    %c0_7 = arith.constant 0 : index
    %10 = vector.load %arg3[%c0_6, %c0_7] : memref<128x128xbf16, #tpu.memory_space<vmem>>, vector<128x128xbf16>
    %cst_8 = arith.constant dense<0.000000e+00> : vector<8x128xf32>
    %11 = tpu.matmul %9, %10, %cst_8 {dimension_numbers = #tpu.dot_dimension_numbers<[1], [0], [0], [1], [0, 0, 1, 1], [], []>} : vector<8x128xbf16>, vector<128x128xbf16>, vector<8x128xf32> -> vector<8x128xf32>
    %c0_9 = arith.constant 0 : index
    %c0_10 = arith.constant 0 : index
    %12 = vector.load %arg6[%c0_9, %c0_10] : memref<1x128xf32, #tpu.memory_space<vmem>>, vector<1x128xf32>
    %13 = vector.broadcast %12 : vector<1x128xf32> to vector<8x128xf32>
    %14 = arith.addf %11, %13 : vector<8x128xf32>
    %cst_11 = arith.constant 0.000000e+00 : f32
    %15 = vector.broadcast %cst_11 : f32 to vector<8x128xf32>
    %16 = arith.maximumf %14, %15 : vector<8x128xf32>
    %17 = arith.truncf %16 : vector<8x128xf32> to vector<8x128xbf16>
    %c0_12 = arith.constant 0 : index
    %c0_13 = arith.constant 0 : index
    %18 = vector.load %arg4[%c0_12, %c0_13] : memref<128x128xbf16, #tpu.memory_space<vmem>>, vector<128x128xbf16>
    %cst_14 = arith.constant dense<0.000000e+00> : vector<8x128xf32>
    %19 = tpu.matmul %17, %18, %cst_14 {dimension_numbers = #tpu.dot_dimension_numbers<[1], [0], [0], [1], [0, 0, 1, 1], [], []>} : vector<8x128xbf16>, vector<128x128xbf16>, vector<8x128xf32> -> vector<8x128xf32>
    %c0_15 = arith.constant 0 : index
    %c0_16 = arith.constant 0 : index
    %20 = vector.load %arg7[%c0_15, %c0_16] : memref<1x128xf32, #tpu.memory_space<vmem>>, vector<1x128xf32>
    %21 = vector.broadcast %20 : vector<1x128xf32> to vector<8x128xf32>
    %22 = arith.addf %19, %21 : vector<8x128xf32>
    %c0_17 = arith.constant 0 : index
    %c0_18 = arith.constant 0 : index
    %23 = vector.load %arg8[%c0_17, %c0_18] : memref<8x128xf32, #tpu.memory_space<vmem>>, vector<8x128xf32>
    tpu.vector_store %arg8[%c0_17, %c0_18], %22 {strides = array<i32>} : memref<8x128xf32, #tpu.memory_space<vmem>>, vector<8x128xf32>,
    return
  }
  func.func @transform_0(%arg0: i32) -> (i32, i32) {
    %c0_i32 = arith.constant 0 : i32
    %c0_i32_0 = arith.constant 0 : i32
    return %arg0, %c0_i32 : i32, i32
  }
  func.func @transform_1(%arg0: i32) -> (i32, i32) {
    %c0_i32 = arith.constant 0 : i32
    %c0_i32_0 = arith.constant 0 : i32
    %c0_i32_1 = arith.constant 0 : i32
    return %c0_i32, %c0_i32_0 : i32, i32
  }
  func.func @transform_2(%arg0: i32) -> (i32, i32) {
    %c0_i32 = arith.constant 0 : i32
    %c0_i32_0 = arith.constant 0 : i32
    %c0_i32_1 = arith.constant 0 : i32
    return %c0_i32, %c0_i32_0 : i32, i32
  }
  func.func @transform_3(%arg0: i32) -> (i32, i32) {
    %c0_i32 = arith.constant 0 : i32
    %c0_i32_0 = arith.constant 0 : i32
    %c0_i32_1 = arith.constant 0 : i32
    return %c0_i32, %c0_i32_0 : i32, i32
  }
  func.func @transform_4(%arg0: i32) -> (i32, i32) {
    %c0_i32 = arith.constant 0 : i32
    %c0_i32_0 = arith.constant 0 : i32
    %c0_i32_1 = arith.constant 0 : i32
    return %c0_i32, %c0_i32_0 : i32, i32
  }
  func.func @transform_5(%arg0: i32) -> (i32, i32) {
    %c0_i32 = arith.constant 0 : i32
    %c0_i32_0 = arith.constant 0 : i32
    %c0_i32_1 = arith.constant 0 : i32
    return %c0_i32, %c0_i32_0 : i32, i32
  }
  func.func @transform_6(%arg0: i32) -> (i32, i32) {
    %c0_i32 = arith.constant 0 : i32
    %c0_i32_0 = arith.constant 0 : i32
    %c0_i32_1 = arith.constant 0 : i32
    return %c0_i32, %c0_i32_0 : i32, i32
  }
  func.func @transform_7(%arg0: i32) -> (i32, i32) {
    %c0_i32 = arith.constant 0 : i32
    %c0_i32_0 = arith.constant 0 : i32
    return %arg0, %c0_i32 : i32, i32
  }
}

module attributes {stable_mosaic.version = 11 : i64} {
  func.func @_fused_mlp_kernel(%arg0: i32, %arg1: memref<8x128xf32, #tpu.memory_space<vmem>>, %arg2: memref<128x128xbf16, #tpu.memory_space<vmem>>, %arg3: memref<128x128xbf16, #tpu.memory_space<vmem>>, %arg4: memref<128x128xbf16, #tpu.memory_space<vmem>>, %arg5: memref<1x128xf32, #tpu.memory_space<vmem>>, %arg6: memref<1x128xf32, #tpu.memory_space<vmem>>, %arg7: memref<1x128xf32, #tpu.memory_space<vmem>>, %arg8: memref<8x128xf32, #tpu.memory_space<vmem>>) attributes {dimension_semantics = [#tpu.dimension_semantics<parallel>], iteration_bounds = array<i64: 1>, scalar_prefetch = 0 : i64, scratch_operands = 0 : i64, tpu.core_type = #tpu.core_type<tc>, window_params = [{transform_indices = @transform_0, window_bounds = array<i64: 8, 128>}, {pipeline_mode = #tpu.pipeline_mode<synchronous>, transform_indices = @transform_1, window_bounds = array<i64: 128, 128>}, {pipeline_mode = #tpu.pipeline_mode<synchronous>, transform_indices = @transform_2, window_bounds = array<i64: 128, 128>}, {pipeline_mode = #tpu.pipeline_mode<synchronous>, transform_indices = @transform_3, window_bounds = array<i64: 128, 128>}, {pipeline_mode = #tpu.pipeline_mode<synchronous>, transform_indices = @transform_4, window_bounds = array<i64: 1, 128>}, {pipeline_mode = #tpu.pipeline_mode<synchronous>, transform_indices = @transform_5, window_bounds = array<i64: 1, 128>}, {pipeline_mode = #tpu.pipeline_mode<synchronous>, transform_indices = @transform_6, window_bounds = array<i64: 1, 128>}, {transform_indices = @transform_7, window_bounds = array<i64: 8, 128>}]} {
    %c0 = arith.constant 0 : index
    %c0_0 = arith.constant 0 : index
    %0 = vector.load %arg1[%c0, %c0_0] : memref<8x128xf32, #tpu.memory_space<vmem>>, vector<8x128xf32>
    %1 = arith.truncf %0 : vector<8x128xf32> to vector<8x128xbf16>
    %c0_1 = arith.constant 0 : index
    %c0_2 = arith.constant 0 : index
    %2 = vector.load %arg2[%c0_1, %c0_2] : memref<128x128xbf16, #tpu.memory_space<vmem>>, vector<128x128xbf16>
    %cst = arith.constant dense<0.000000e+00> : vector<8x128xf32>
    %3 = tpu.matmul %1, %2, %cst {dimension_numbers = #tpu.dot_dimension_numbers<[1], [0], [0], [1], [0, 0, 1, 1], [], []>} : vector<8x128xbf16>, vector<128x128xbf16>, vector<8x128xf32> -> vector<8x128xf32>
    %c0_3 = arith.constant 0 : index
    %c0_4 = arith.constant 0 : index
    %4 = vector.load %arg5[%c0_3, %c0_4] : memref<1x128xf32, #tpu.memory_space<vmem>>, vector<1x128xf32>
    %5 = vector.broadcast %4 : vector<1x128xf32> to vector<8x128xf32>
    %6 = arith.addf %3, %5 : vector<8x128xf32>
    %cst_5 = arith.constant 0.000000e+00 : f32
    %7 = vector.broadcast %cst_5 : f32 to vector<8x128xf32>
    %8 = arith.maximumf %6, %7 : vector<8x128xf32>
    %9 = arith.truncf %8 : vector<8x128xf32> to vector<8x128xbf16>
    %c0_6 = arith.constant 0 : index
    %c0_7 = arith.constant 0 : index
    %10 = vector.load %arg3[%c0_6, %c0_7] : memref<128x128xbf16, #tpu.memory_space<vmem>>, vector<128x128xbf16>
    %cst_8 = arith.constant dense<0.000000e+00> : vector<8x128xf32>
    %11 = tpu.matmul %9, %10, %cst_8 {dimension_numbers = #tpu.dot_dimension_numbers<[1], [0], [0], [1], [0, 0, 1, 1], [], []>} : vector<8x128xbf16>, vector<128x128xbf16>, vector<8x128xf32> -> vector<8x128xf32>
    %c0_9 = arith.constant 0 : index
    %c0_10 = arith.constant 0 : index
    %12 = vector.load %arg6[%c0_9, %c0_10] : memref<1x128xf32, #tpu.memory_space<vmem>>, vector<1x128xf32>
    %13 = vector.broadcast %12 : vector<1x128xf32> to vector<8x128xf32>
    %14 = arith.addf %11, %13 : vector<8x128xf32>
    %cst_11 = arith.constant 0.000000e+00 : f32
    %15 = vector.broadcast %cst_11 : f32 to vector<8x128xf32>
    %16 = arith.maximumf %14, %15 : vector<8x128xf32>
    %17 = arith.truncf %16 : vector<8x128xf32> to vector<8x128xbf16>
    %c0_12 = arith.constant 0 : index
    %c0_13 = arith.constant 0 : index
    %18 = vector.load %arg4[%c0_12, %c0_13] : memref<128x128xbf16, #tpu.memory_space<vmem>>, vector<128x128xbf16>
    %cst_14 = arith.constant dense<0.000000e+00> : vector<8x128xf32>
    %19 = tpu.matmul %17, %18, %cst_14 {dimension_numbers = #tpu.dot_dimension_numbers<[1], [0], [0], [1], [0, 0, 1, 1], [], []>} : vector<8x128xbf16>, vector<128x128xbf16>, vector<8x128xf32> -> vector<8x128xf32>
    %c0_15 = arith.constant 0 : index
    %c0_16 = arith.constant 0 : index
    %20 = vector.load %arg7[%c0_15, %c0_16] : memref<1x128xf32, #tpu.memory_space<vmem>>, vector<1x128xf32>
    %21 = vector.broadcast %20 : vector<1x128xf32> to vector<8x128xf32>
    %22 = arith.addf %19, %21 : vector<8x128xf32>
    %c0_17 = arith.constant 0 : index
    %c0_18 = arith.constant 0 : index
    %23 = vector.load %arg8[%c0_17, %c0_18] : memref<8x128xf32, #tpu.memory_space<vmem>>, vector<8x128xf32>
    tpu.vector_store %arg8[%c0_17, %c0_18], %22 {strides = array<i32>} : memref<8x128xf32, #tpu.memory_space<vmem>>, vector<8x128xf32>,
    return
  }
  func.func @transform_0(%arg0: i32) -> (i32, i32) {
    %c0_i32 = arith.constant 0 : i32
    %c0_i32_0 = arith.constant 0 : i32
    return %arg0, %c0_i32 : i32, i32
  }
  func.func @transform_1(%arg0: i32) -> (i32, i32) {
    %c0_i32 = arith.constant 0 : i32
    %c0_i32_0 = arith.constant 0 : i32
    %c0_i32_1 = arith.constant 0 : i32
    return %c0_i32, %c0_i32_0 : i32, i32
  }
  func.func @transform_2(%arg0: i32) -> (i32, i32) {
    %c0_i32 = arith.constant 0 : i32
    %c0_i32_0 = arith.constant 0 : i32
    %c0_i32_1 = arith.constant 0 : i32
    return %c0_i32, %c0_i32_0 : i32, i32
  }
  func.func @transform_3(%arg0: i32) -> (i32, i32) {
    %c0_i32 = arith.constant 0 : i32
    %c0_i32_0 = arith.constant 0 : i32
    %c0_i32_1 = arith.constant 0 : i32
    return %c0_i32, %c0_i32_0 : i32, i32
  }
  func.func @transform_4(%arg0: i32) -> (i32, i32) {
    %c0_i32 = arith.constant 0 : i32
    %c0_i32_0 = arith.constant 0 : i32
    %c0_i32_1 = arith.constant 0 : i32
    return %c0_i32, %c0_i32_0 : i32, i32
  }
  func.func @transform_5(%arg0: i32) -> (i32, i32) {
    %c0_i32 = arith.constant 0 : i32
    %c0_i32_0 = arith.constant 0 : i32
    %c0_i32_1 = arith.constant 0 : i32
    return %c0_i32, %c0_i32_0 : i32, i32
  }
  func.func @transform_6(%arg0: i32) -> (i32, i32) {
    %c0_i32 = arith.constant 0 : i32
    %c0_i32_0 = arith.constant 0 : i32
    %c0_i32_1 = arith.constant 0 : i32
    return %c0_i32, %c0_i32_0 : i32, i32
  }
  func.func @transform_7(%arg0: i32) -> (i32, i32) {
    %c0_i32 = arith.constant 0 : i32
    %c0_i32_0 = arith.constant 0 : i32
    return %arg0, %c0_i32 : i32, i32
  }
}

</mosaic_0001>

<llo_original>
// kernel: ptdeep_forward.1
$region0: #{ptdeep_forward.1}
  #allocation0 [shape = 'u32[]', space=smem, size = 0x4, offset = 0x4, fixed_abs, tag = 'smem constant byte address 0x4 - core index']
  #allocation1 [shape = 'u32[72,128]{1,0:T(1,128)}', space=vmem, size = 0x9000, scoped, tag = 'internal scratch']
  %s0 = inlined_call_operand.vmem [shape: f32[8,128], index: 0, kind: input, shape index: {}]
  %s1 = inlined_call_operand.hbm [shape: bf16[128,128], index: 1, kind: input, shape index: {}]
  %s2 = inlined_call_operand.hbm [shape: bf16[128,128], index: 2, kind: input, shape index: {}]
  %s3 = inlined_call_operand.hbm [shape: bf16[128,128], index: 3, kind: input, shape index: {}]
  %s4 = inlined_call_operand.vmem [shape: f32[1,128], index: 4, kind: input, shape index: {}]
  %s5 = inlined_call_operand.vmem [shape: f32[1,128], index: 5, kind: input, shape index: {}]
  %s6 = inlined_call_operand.vmem [shape: f32[1,128], index: 6, kind: input, shape index: {}]
  %s7 = inlined_call_operand.hbm [shape: f32[8,128], index: 7, kind: output, shape index: {}]
  %s8 = sld [smem:[#allocation0]]
  $region50: #{ptdeep_forward.1} parent=0
    _
  %s10 = ssub.s32 1, %s8
  %s11 = scalar_select 0, %s10, %s8
  $region1: #{ptdeep_forward.1} parent=0
    #allocation2 [shape = 'u8[32768]{0}', space=vmem, size = 0x8000, scoped, tag = 'input window, operand 1, single buffered']
    #allocation3 [shape = 's32[1]{0}', space=sflag, size = 0x4, scoped, tag = 'scoped memory for ptdeep_forward.1']
    #allocation4 [shape = 's32[1]{0}', space=sflag, size = 0x4, scoped, tag = 'scoped memory for ptdeep_forward.1']
    #allocation5 [shape = 'u8[32768]{0}', space=vmem, size = 0x8000, scoped, tag = 'input window, operand 2, single buffered']
    #allocation6 [shape = 's32[1]{0}', space=sflag, size = 0x4, scoped, tag = 'scoped memory for ptdeep_forward.1']
    #allocation7 [shape = 'u8[32768]{0}', space=vmem, size = 0x8000, scoped, tag = 'input window, operand 3, single buffered']
    #allocation8 [shape = 'u8[4096]{0}', space=vmem, size = 0x1000, scoped, tag = 'output window, operand 0, single buffered']
    %12 = vsyncpa [#allocation3], 0
    %13 = vsyncpa [#allocation6], 0
    %14 = vsyncpa [#allocation4], 0
    // Predicated region
    $region2: #{ptdeep_forward.1} parent=1 // pred_check
      _
    $region3: #{ptdeep_forward.1} parent=1 // pred_check_branch
      %16 = sbr.rel (0) target = $region5
    $region4: #{ptdeep_forward.1} parent=1 // pred_region
      _
    $region5: #{ptdeep_forward.1} parent=1 // pred_fallthru
      _
    // Predicated region
    $region6: #{ptdeep_forward.1} parent=1 // pred_check
      _
    $region7: #{ptdeep_forward.1} parent=1 // pred_check_branch
      %18 = sbr.rel (0) target = $region9
    $region8: #{ptdeep_forward.1} parent=1 // pred_region
      %20 = vsyncadd [#allocation3], 0
      %s21 = sshll.u32 %s1, 4
      %s22 = int_to_ptr.hbm [resolvable:$true] %s21
      %s23 = sshll.u32 [#allocation2], 4
      %s24 = int_to_ptr.vmem [resolvable:$true] %s23
      %29 = dma.hbm_to_vmem [thread:$0]  %s22, 1024, %s24, [#allocation3], 64, 64, 4
    $region9: #{ptdeep_forward.1} parent=1 // pred_fallthru
      _
    // Predicated region
    $region10: #{ptdeep_forward.1} parent=1 // pred_check
      _
    $region11: #{ptdeep_forward.1} parent=1 // pred_check_branch
      %31 = sbr.rel (0) target = $region13
    $region12: #{ptdeep_forward.1} parent=1 // pred_region
      %33 = vsyncadd [#allocation6], 0
      %s34 = sshll.u32 %s2, 4
      %s35 = int_to_ptr.hbm [resolvable:$true] %s34
      %s36 = sshll.u32 [#allocation5], 4
      %s37 = int_to_ptr.vmem [resolvable:$true] %s36
      %42 = dma.hbm_to_vmem [thread:$0]  %s35, 1024, %s37, [#allocation6], 64, 64, 4
    $region13: #{ptdeep_forward.1} parent=1 // pred_fallthru
      _
    // Predicated region
    $region14: #{ptdeep_forward.1} parent=1 // pred_check
      _
    $region15: #{ptdeep_forward.1} parent=1 // pred_check_branch
      %44 = sbr.rel (0) target = $region17
    $region16: #{ptdeep_forward.1} parent=1 // pred_region
      %46 = vsyncadd [#allocation6], 0
      %s47 = sshll.u32 %s3, 4
      %s48 = int_to_ptr.hbm [resolvable:$true] %s47
      %s49 = sshll.u32 [#allocation7], 4
      %s50 = int_to_ptr.vmem [resolvable:$true] %s49
      %55 = dma.hbm_to_vmem [thread:$0]  %s48, 1024, %s50, [#allocation6], 64, 64, 4
    $region17: #{ptdeep_forward.1} parent=1 // pred_fallthru
      _
    // Predicated region
    $region18: #{ptdeep_forward.1} parent=1 // pred_check
      _
    $region19: #{ptdeep_forward.1} parent=1 // pred_check_branch
      %57 = sbr.rel (0) target = $region21
    $region20: #{ptdeep_forward.1} parent=1 // pred_region
      _
    $region21: #{ptdeep_forward.1} parent=1 // pred_fallthru
      _
    // Predicated region
    $region22: #{ptdeep_forward.1} parent=1 // pred_check
      _
    $region23: #{ptdeep_forward.1} parent=1 // pred_check_branch
      %59 = sbr.rel (0) target = $region25
    $region24: #{ptdeep_forward.1} parent=1 // pred_region
      _
    $region25: #{ptdeep_forward.1} parent=1 // pred_fallthru
      _
    // Predicated region
    $region26: #{ptdeep_forward.1} parent=1 // pred_check
      _
    $region27: #{ptdeep_forward.1} parent=1 // pred_check_branch
      %61 = sbr.rel (0) target = $region29
    $region28: #{ptdeep_forward.1} parent=1 // pred_region
      _
    $region29: #{ptdeep_forward.1} parent=1 // pred_fallthru
      _
    // Predicated region
    $region30: #{ptdeep_forward.1} parent=1 // pred_check
      _
    $region31: #{ptdeep_forward.1} parent=1 // pred_check_branch
      %63 = sbr.rel (0) target = $region33
    $region32: #{ptdeep_forward.1} parent=1 // pred_region
      %65 = dma.done [#allocation3], 1024
    $region33: #{ptdeep_forward.1} parent=1 // pred_fallthru
      _
    // Predicated region
    $region34: #{ptdeep_forward.1} parent=1 // pred_check
      _
    $region35: #{ptdeep_forward.1} parent=1 // pred_check_branch
      %67 = sbr.rel (0) target = $region37
    $region36: #{ptdeep_forward.1} parent=1 // pred_region
      %69 = dma.done [#allocation6], 1024
    $region37: #{ptdeep_forward.1} parent=1 // pred_fallthru
      _
    // Predicated region
    $region38: #{ptdeep_forward.1} parent=1 // pred_check
      _
    $region39: #{ptdeep_forward.1} parent=1 // pred_check_branch
      %71 = sbr.rel (0) target = $region41
    $region40: #{ptdeep_forward.1} parent=1 // pred_region
      %73 = dma.done [#allocation6], 1024
    $region41: #{ptdeep_forward.1} parent=1 // pred_fallthru
      _
    %v74 = vld [vmem:[%s0] sm:$0xff]
    %v75 = vpack.c.bf16 %v74, %v74
    %v76 = vld [vmem:[#allocation2] sm:$0xf]
    %v77 = vld [vmem:[#allocation2 + $0x4] sm:$0xf]
    %v78 = vld [vmem:[#allocation2 + $0x8] sm:$0xf]
    %v79 = vld [vmem:[#allocation2 + $0xc] sm:$0xf]
    %v80 = vld [vmem:[#allocation2 + $0x10] sm:$0xf]
    %v81 = vld [vmem:[#allocation2 + $0x14] sm:$0xf]
    %v82 = vld [vmem:[#allocation2 + $0x18] sm:$0xf]
    %v83 = vld [vmem:[#allocation2 + $0x1c] sm:$0xf]
    %v84 = vld [vmem:[#allocation2 + $0x20] sm:$0xf]
    %v85 = vld [vmem:[#allocation2 + $0x24] sm:$0xf]
    %v86 = vld [vmem:[#allocation2 + $0x28] sm:$0xf]
    %v87 = vld [vmem:[#allocation2 + $0x2c] sm:$0xf]
    %v88 = vld [vmem:[#allocation2 + $0x30] sm:$0xf]
    %v89 = vld [vmem:[#allocation2 + $0x34] sm:$0xf]
    %v90 = vld [vmem:[#allocation2 + $0x38] sm:$0xf]
    %v91 = vld [vmem:[#allocation2 + $0x3c] sm:$0xf]
    %v92 = vld [vmem:[%s4] sm:$0x1]
    %v94 = vperm.slane %v92, 0
    %v112 = vunpack.c.l.b16 %v76
    %v113 = vunpack.c.l.b16 %v77
    %v114 = vunpack.c.l.b16 %v78
    %v115 = vunpack.c.l.b16 %v79
    %v116 = vunpack.c.l.b16 %v80
    %v117 = vunpack.c.l.b16 %v81
    %v118 = vunpack.c.l.b16 %v82
    %v119 = vunpack.c.l.b16 %v83
    %v120 = vunpack.c.l.b16 %v84
    %v121 = vunpack.c.l.b16 %v85
    %v122 = vunpack.c.l.b16 %v86
    %v123 = vunpack.c.l.b16 %v87
    %v124 = vunpack.c.l.b16 %v88
    %v125 = vunpack.c.l.b16 %v89
    %v126 = vunpack.c.l.b16 %v90
    %v127 = vunpack.c.l.b16 %v91
    %v128 = vpack.c.b16 %v113, %v112
    %v129 = vpack.c.b16 %v115, %v114
    %v130 = vpack.c.b16 %v117, %v116
    %v131 = vpack.c.b16 %v119, %v118
    %v132 = vpack.c.b16 %v121, %v120
    %v133 = vpack.c.b16 %v123, %v122
    %v134 = vpack.c.b16 %v125, %v124
    %v135 = vpack.c.b16 %v127, %v126
    %144 = vmatpush.bf16.msra.mxu0 %v135
    %145 = vmatpush.bf16.msra.mxu0 %v134
    %146 = vmatpush.bf16.msra.mxu0 %v133
    %147 = vmatpush.bf16.msra.mxu0 %v132
    %148 = vmatpush.bf16.msra.mxu0 %v131
    %149 = vmatpush.bf16.msra.mxu0 %v130
    %150 = vmatpush.bf16.msra.mxu0 %v129
    %151 = vmatpush.bf16.msra.mxu0 %v128
    %152 = vmatmul.bf16.gmra.mxu0 %v75
    %v153 = vpop.f32.mrf.mxu0
    %v154 = vadd.f32 %v94, %v153
    %v155 = vpop.f32.mrf.mxu0
    %156 = vdwg.mxu0
    %v157 = vmax.f32 %v154, 0.0
    %v158 = vpack.c.bf16 %v157, %v157
    %v159 = vld [vmem:[#allocation5] sm:$0xf]
    %v160 = vld [vmem:[#allocation5 + $0x4] sm:$0xf]
    %v161 = vld [vmem:[#allocation5 + $0x8] sm:$0xf]
    %v162 = vld [vmem:[#allocation5 + $0xc] sm:$0xf]
    %v163 = vld [vmem:[#allocation5 + $0x10] sm:$0xf]
    %v164 = vld [vmem:[#allocation5 + $0x14] sm:$0xf]
    %v165 = vld [vmem:[#allocation5 + $0x18] sm:$0xf]
    %v166 = vld [vmem:[#allocation5 + $0x1c] sm:$0xf]
    %v167 = vld [vmem:[#allocation5 + $0x20] sm:$0xf]
    %v168 = vld [vmem:[#allocation5 + $0x24] sm:$0xf]
    %v169 = vld [vmem:[#allocation5 + $0x28] sm:$0xf]
    %v170 = vld [vmem:[#allocation5 + $0x2c] sm:$0xf]
    %v171 = vld [vmem:[#allocation5 + $0x30] sm:$0xf]
    %v172 = vld [vmem:[#allocation5 + $0x34] sm:$0xf]
    %v173 = vld [vmem:[#allocation5 + $0x38] sm:$0xf]
    %v174 = vld [vmem:[#allocation5 + $0x3c] sm:$0xf]
    %v175 = vld [vmem:[%s5] sm:$0x1]
    %v177 = vperm.slane %v175, 0
    %v195 = vunpack.c.l.b16 %v159
    %v196 = vunpack.c.l.b16 %v160
    %v197 = vunpack.c.l.b16 %v161
    %v198 = vunpack.c.l.b16 %v162
    %v199 = vunpack.c.l.b16 %v163
    %v200 = vunpack.c.l.b16 %v164
    %v201 = vunpack.c.l.b16 %v165
    %v202 = vunpack.c.l.b16 %v166
    %v203 = vunpack.c.l.b16 %v167
    %v204 = vunpack.c.l.b16 %v168
    %v205 = vunpack.c.l.b16 %v169
    %v206 = vunpack.c.l.b16 %v170
    %v207 = vunpack.c.l.b16 %v171
    %v208 = vunpack.c.l.b16 %v172
    %v209 = vunpack.c.l.b16 %v173
    %v210 = vunpack.c.l.b16 %v174
    %v211 = vpack.c.b16 %v196, %v195
    %v212 = vpack.c.b16 %v198, %v197
    %v213 = vpack.c.b16 %v200, %v199
    %v214 = vpack.c.b16 %v202, %v201
    %v215 = vpack.c.b16 %v204, %v203
    %v216 = vpack.c.b16 %v206, %v205
    %v217 = vpack.c.b16 %v208, %v207
    %v218 = vpack.c.b16 %v210, %v209
    %227 = vmatpush.bf16.msra.mxu0 %v218
    %228 = vmatpush.bf16.msra.mxu0 %v217
    %229 = vmatpush.bf16.msra.mxu0 %v216
    %230 = vmatpush.bf16.msra.mxu0 %v215
    %231 = vmatpush.bf16.msra.mxu0 %v214
    %232 = vmatpush.bf16.msra.mxu0 %v213
    %233 = vmatpush.bf16.msra.mxu0 %v212
    %234 = vmatpush.bf16.msra.mxu0 %v211
    %235 = vmatmul.bf16.gmra.mxu0 %v158
    %v236 = vpop.f32.mrf.mxu0
    %v237 = vadd.f32 %v177, %v236
    %v238 = vpop.f32.mrf.mxu0
    %239 = vdwg.mxu0
    %v240 = vmax.f32 %v237, 0.0
    %v241 = vpack.c.bf16 %v240, %v240
    %v242 = vld [vmem:[#allocation7] sm:$0xf]
    %v243 = vld [vmem:[#allocation7 + $0x4] sm:$0xf]
    %v244 = vld [vmem:[#allocation7 + $0x8] sm:$0xf]
    %v245 = vld [vmem:[#allocation7 + $0xc] sm:$0xf]
    %v246 = vld [vmem:[#allocation7 + $0x10] sm:$0xf]
    %v247 = vld [vmem:[#allocation7 + $0x14] sm:$0xf]
    %v248 = vld [vmem:[#allocation7 + $0x18] sm:$0xf]
    %v249 = vld [vmem:[#allocation7 + $0x1c] sm:$0xf]
    %v250 = vld [vmem:[#allocation7 + $0x20] sm:$0xf]
    %v251 = vld [vmem:[#allocation7 + $0x24] sm:$0xf]
    %v252 = vld [vmem:[#allocation7 + $0x28] sm:$0xf]
    %v253 = vld [vmem:[#allocation7 + $0x2c] sm:$0xf]
    %v254 = vld [vmem:[#allocation7 + $0x30] sm:$0xf]
    %v255 = vld [vmem:[#allocation7 + $0x34] sm:$0xf]
    %v256 = vld [vmem:[#allocation7 + $0x38] sm:$0xf]
    %v257 = vld [vmem:[#allocation7 + $0x3c] sm:$0xf]
    %v258 = vld [vmem:[%s6] sm:$0x1]
    %v260 = vperm.slane %v258, 0
    %v278 = vunpack.c.l.b16 %v242
    %v279 = vunpack.c.l.b16 %v243
    %v280 = vunpack.c.l.b16 %v244
    %v281 = vunpack.c.l.b16 %v245
    %v282 = vunpack.c.l.b16 %v246
    %v283 = vunpack.c.l.b16 %v247
    %v284 = vunpack.c.l.b16 %v248
    %v285 = vunpack.c.l.b16 %v249
    %v286 = vunpack.c.l.b16 %v250
    %v287 = vunpack.c.l.b16 %v251
    %v288 = vunpack.c.l.b16 %v252
    %v289 = vunpack.c.l.b16 %v253
    %v290 = vunpack.c.l.b16 %v254
    %v291 = vunpack.c.l.b16 %v255
    %v292 = vunpack.c.l.b16 %v256
    %v293 = vunpack.c.l.b16 %v257
    %v294 = vpack.c.b16 %v279, %v278
    %v295 = vpack.c.b16 %v281, %v280
    %v296 = vpack.c.b16 %v283, %v282
    %v297 = vpack.c.b16 %v285, %v284
    %v298 = vpack.c.b16 %v287, %v286
    %v299 = vpack.c.b16 %v289, %v288
    %v300 = vpack.c.b16 %v291, %v290
    %v301 = vpack.c.b16 %v293, %v292
    %310 = vmatpush.bf16.msra.mxu0 %v301
    %311 = vmatpush.bf16.msra.mxu0 %v300
    %312 = vmatpush.bf16.msra.mxu0 %v299
    %313 = vmatpush.bf16.msra.mxu0 %v298
    %314 = vmatpush.bf16.msra.mxu0 %v297
    %315 = vmatpush.bf16.msra.mxu0 %v296
    %316 = vmatpush.bf16.msra.mxu0 %v295
    %317 = vmatpush.bf16.msra.mxu0 %v294
    %318 = vmatmul.bf16.gmra.mxu0 %v241
    %v319 = vpop.f32.mrf.mxu0
    %v320 = vadd.f32 %v260, %v319
    %v321 = vpop.f32.mrf.mxu0
    %322 = vdwg.mxu0
    %323 = vst [vmem:[#allocation8] sm:$0xff] %v320
    // Predicated region
    $region42: #{ptdeep_forward.1} parent=1 // pred_check
      _
    $region43: #{ptdeep_forward.1} parent=1 // pred_check_branch
      %325 = sbr.rel (0) target = $region45
    $region44: #{ptdeep_forward.1} parent=1 // pred_region
      %327 = vsyncadd [#allocation4], 0
      %s329 = sshll.u32 [#allocation8], 4
      %s330 = int_to_ptr.vmem [resolvable:$true] %s329
      %s331 = sshll.u32 %s7, 4
      %s332 = int_to_ptr.hbm [resolvable:$true] %s331
      %334 = dma.vmem_to_hbm [thread:$0]  %s330, 128, %s332, [#allocation4]
    $region45: #{ptdeep_forward.1} parent=1 // pred_fallthru
      _
    // Predicated region
    $region46: #{ptdeep_forward.1} parent=1 // pred_check
      _
    $region47: #{ptdeep_forward.1} parent=1 // pred_check_branch
      %336 = sbr.rel (0) target = $region49
    $region48: #{ptdeep_forward.1} parent=1 // pred_region
      %338 = dma.done [#allocation4], 128
    $region49: #{ptdeep_forward.1} parent=1 // pred_fallthru
      _
    %339 = vsyncpa [#allocation3], 1
    %340 = vsyncpa [#allocation6], 1
    %341 = vsyncpa [#allocation4], 1

// kernel: ptdeep_forward.1
$region0: #{ptdeep_forward.1}
  #allocation0 [shape = 'u32[]', space=smem, size = 0x4, offset = 0x4, fixed_abs, tag = 'smem constant byte address 0x4 - core index']
  #allocation1 [shape = 'u32[72,128]{1,0:T(1,128)}', space=vmem, size = 0x9000, scoped, tag = 'internal scratch']
  %s0 = inlined_call_operand.vmem [shape: f32[8,128], index: 0, kind: input, shape index: {}]
  %s1 = inlined_call_operand.hbm [shape: bf16[128,128], index: 1, kind: input, shape index: {}]
  %s2 = inlined_call_operand.hbm [shape: bf16[128,128], index: 2, kind: input, shape index: {}]
  %s3 = inlined_call_operand.hbm [shape: bf16[128,128], index: 3, kind: input, shape index: {}]
  %s4 = inlined_call_operand.vmem [shape: f32[1,128], index: 4, kind: input, shape index: {}]
  %s5 = inlined_call_operand.vmem [shape: f32[1,128], index: 5, kind: input, shape index: {}]
  %s6 = inlined_call_operand.vmem [shape: f32[1,128], index: 6, kind: input, shape index: {}]
  %s7 = inlined_call_operand.hbm [shape: f32[8,128], index: 7, kind: output, shape index: {}]
  %s8 = sld [smem:[#allocation0]]
  $region50: #{ptdeep_forward.1} parent=0
    _
  %s10 = ssub.s32 1, %s8
  %s11 = scalar_select 0, %s10, %s8
  $region1: #{ptdeep_forward.1} parent=0
    #allocation2 [shape = 'u8[32768]{0}', space=vmem, size = 0x8000, scoped, tag = 'input window, operand 1, single buffered']
    #allocation3 [shape = 's32[1]{0}', space=sflag, size = 0x4, scoped, tag = 'scoped memory for ptdeep_forward.1']
    #allocation4 [shape = 's32[1]{0}', space=sflag, size = 0x4, scoped, tag = 'scoped memory for ptdeep_forward.1']
    #allocation5 [shape = 'u8[32768]{0}', space=vmem, size = 0x8000, scoped, tag = 'input window, operand 2, single buffered']
    #allocation6 [shape = 's32[1]{0}', space=sflag, size = 0x4, scoped, tag = 'scoped memory for ptdeep_forward.1']
    #allocation7 [shape = 'u8[32768]{0}', space=vmem, size = 0x8000, scoped, tag = 'input window, operand 3, single buffered']
    #allocation8 [shape = 'u8[4096]{0}', space=vmem, size = 0x1000, scoped, tag = 'output window, operand 0, single buffered']
    %12 = vsyncpa [#allocation3], 0
    %13 = vsyncpa [#allocation6], 0
    %14 = vsyncpa [#allocation4], 0
    // Predicated region
    $region2: #{ptdeep_forward.1} parent=1 // pred_check
      _
    $region3: #{ptdeep_forward.1} parent=1 // pred_check_branch
      %16 = sbr.rel (0) target = $region5
    $region4: #{ptdeep_forward.1} parent=1 // pred_region
      _
    $region5: #{ptdeep_forward.1} parent=1 // pred_fallthru
      _
    // Predicated region
    $region6: #{ptdeep_forward.1} parent=1 // pred_check
      _
    $region7: #{ptdeep_forward.1} parent=1 // pred_check_branch
      %18 = sbr.rel (0) target = $region9
    $region8: #{ptdeep_forward.1} parent=1 // pred_region
      %20 = vsyncadd [#allocation3], 0
      %s21 = sshll.u32 %s1, 4
      %s22 = int_to_ptr.hbm [resolvable:$true] %s21
      %s23 = sshll.u32 [#allocation2], 4
      %s24 = int_to_ptr.vmem [resolvable:$true] %s23
      %29 = dma.hbm_to_vmem [thread:$0]  %s22, 1024, %s24, [#allocation3], 64, 64, 4
    $region9: #{ptdeep_forward.1} parent=1 // pred_fallthru
      _
    // Predicated region
    $region10: #{ptdeep_forward.1} parent=1 // pred_check
      _
    $region11: #{ptdeep_forward.1} parent=1 // pred_check_branch
      %31 = sbr.rel (0) target = $region13
    $region12: #{ptdeep_forward.1} parent=1 // pred_region
      %33 = vsyncadd [#allocation6], 0
      %s34 = sshll.u32 %s2, 4
      %s35 = int_to_ptr.hbm [resolvable:$true] %s34
      %s36 = sshll.u32 [#allocation5], 4
      %s37 = int_to_ptr.vmem [resolvable:$true] %s36
      %42 = dma.hbm_to_vmem [thread:$0]  %s35, 1024, %s37, [#allocation6], 64, 64, 4
    $region13: #{ptdeep_forward.1} parent=1 // pred_fallthru
      _
    // Predicated region
    $region14: #{ptdeep_forward.1} parent=1 // pred_check
      _
    $region15: #{ptdeep_forward.1} parent=1 // pred_check_branch
      %44 = sbr.rel (0) target = $region17
    $region16: #{ptdeep_forward.1} parent=1 // pred_region
      %46 = vsyncadd [#allocation6], 0
      %s47 = sshll.u32 %s3, 4
      %s48 = int_to_ptr.hbm [resolvable:$true] %s47
      %s49 = sshll.u32 [#allocation7], 4
      %s50 = int_to_ptr.vmem [resolvable:$true] %s49
      %55 = dma.hbm_to_vmem [thread:$0]  %s48, 1024, %s50, [#allocation6], 64, 64, 4
    $region17: #{ptdeep_forward.1} parent=1 // pred_fallthru
      _
    // Predicated region
    $region18: #{ptdeep_forward.1} parent=1 // pred_check
      _
    $region19: #{ptdeep_forward.1} parent=1 // pred_check_branch
      %57 = sbr.rel (0) target = $region21
    $region20: #{ptdeep_forward.1} parent=1 // pred_region
      _
    $region21: #{ptdeep_forward.1} parent=1 // pred_fallthru
      _
    // Predicated region
    $region22: #{ptdeep_forward.1} parent=1 // pred_check
      _
    $region23: #{ptdeep_forward.1} parent=1 // pred_check_branch
      %59 = sbr.rel (0) target = $region25
    $region24: #{ptdeep_forward.1} parent=1 // pred_region
      _
    $region25: #{ptdeep_forward.1} parent=1 // pred_fallthru
      _
    // Predicated region
    $region26: #{ptdeep_forward.1} parent=1 // pred_check
      _
    $region27: #{ptdeep_forward.1} parent=1 // pred_check_branch
      %61 = sbr.rel (0) target = $region29
    $region28: #{ptdeep_forward.1} parent=1 // pred_region
      _
    $region29: #{ptdeep_forward.1} parent=1 // pred_fallthru
      _
    // Predicated region
    $region30: #{ptdeep_forward.1} parent=1 // pred_check
      _
    $region31: #{ptdeep_forward.1} parent=1 // pred_check_branch
      %63 = sbr.rel (0) target = $region33
    $region32: #{ptdeep_forward.1} parent=1 // pred_region
      %65 = dma.done [#allocation3], 1024
    $region33: #{ptdeep_forward.1} parent=1 // pred_fallthru
      _
    // Predicated region
    $region34: #{ptdeep_forward.1} parent=1 // pred_check
      _
    $region35: #{ptdeep_forward.1} parent=1 // pred_check_branch
      %67 = sbr.rel (0) target = $region37
    $region36: #{ptdeep_forward.1} parent=1 // pred_region
      %69 = dma.done [#allocation6], 1024
    $region37: #{ptdeep_forward.1} parent=1 // pred_fallthru
      _
    // Predicated region
    $region38: #{ptdeep_forward.1} parent=1 // pred_check
      _
    $region39: #{ptdeep_forward.1} parent=1 // pred_check_branch
      %71 = sbr.rel (0) target = $region41
    $region40: #{ptdeep_forward.1} parent=1 // pred_region
      %73 = dma.done [#allocation6], 1024
    $region41: #{ptdeep_forward.1} parent=1 // pred_fallthru
      _
    %v74 = vld [vmem:[%s0] sm:$0xff]
    %v75 = vpack.c.bf16 %v74, %v74
    %v76 = vld [vmem:[#allocation2] sm:$0xf]
    %v77 = vld [vmem:[#allocation2 + $0x4] sm:$0xf]
    %v78 = vld [vmem:[#allocation2 + $0x8] sm:$0xf]
    %v79 = vld [vmem:[#allocation2 + $0xc] sm:$0xf]
    %v80 = vld [vmem:[#allocation2 + $0x10] sm:$0xf]
    %v81 = vld [vmem:[#allocation2 + $0x14] sm:$0xf]
    %v82 = vld [vmem:[#allocation2 + $0x18] sm:$0xf]
    %v83 = vld [vmem:[#allocation2 + $0x1c] sm:$0xf]
    %v84 = vld [vmem:[#allocation2 + $0x20] sm:$0xf]
    %v85 = vld [vmem:[#allocation2 + $0x24] sm:$0xf]
    %v86 = vld [vmem:[#allocation2 + $0x28] sm:$0xf]
    %v87 = vld [vmem:[#allocation2 + $0x2c] sm:$0xf]
    %v88 = vld [vmem:[#allocation2 + $0x30] sm:$0xf]
    %v89 = vld [vmem:[#allocation2 + $0x34] sm:$0xf]
    %v90 = vld [vmem:[#allocation2 + $0x38] sm:$0xf]
    %v91 = vld [vmem:[#allocation2 + $0x3c] sm:$0xf]
    %v92 = vld [vmem:[%s4] sm:$0x1]
    %v94 = vperm.slane %v92, 0
    %v112 = vunpack.c.l.b16 %v76
    %v113 = vunpack.c.l.b16 %v77
    %v114 = vunpack.c.l.b16 %v78
    %v115 = vunpack.c.l.b16 %v79
    %v116 = vunpack.c.l.b16 %v80
    %v117 = vunpack.c.l.b16 %v81
    %v118 = vunpack.c.l.b16 %v82
    %v119 = vunpack.c.l.b16 %v83
    %v120 = vunpack.c.l.b16 %v84
    %v121 = vunpack.c.l.b16 %v85
    %v122 = vunpack.c.l.b16 %v86
    %v123 = vunpack.c.l.b16 %v87
    %v124 = vunpack.c.l.b16 %v88
    %v125 = vunpack.c.l.b16 %v89
    %v126 = vunpack.c.l.b16 %v90
    %v127 = vunpack.c.l.b16 %v91
    %v128 = vpack.c.b16 %v113, %v112
    %v129 = vpack.c.b16 %v115, %v114
    %v130 = vpack.c.b16 %v117, %v116
    %v131 = vpack.c.b16 %v119, %v118
    %v132 = vpack.c.b16 %v121, %v120
    %v133 = vpack.c.b16 %v123, %v122
    %v134 = vpack.c.b16 %v125, %v124
    %v135 = vpack.c.b16 %v127, %v126
    %144 = vmatpush.bf16.msra.mxu0 %v135
    %145 = vmatpush.bf16.msra.mxu0 %v134
    %146 = vmatpush.bf16.msra.mxu0 %v133
    %147 = vmatpush.bf16.msra.mxu0 %v132
    %148 = vmatpush.bf16.msra.mxu0 %v131
    %149 = vmatpush.bf16.msra.mxu0 %v130
    %150 = vmatpush.bf16.msra.mxu0 %v129
    %151 = vmatpush.bf16.msra.mxu0 %v128
    %152 = vmatmul.bf16.gmra.mxu0 %v75
    %v153 = vpop.f32.mrf.mxu0
    %v154 = vadd.f32 %v94, %v153
    %v155 = vpop.f32.mrf.mxu0
    %156 = vdwg.mxu0
    %v157 = vmax.f32 %v154, 0.0
    %v158 = vpack.c.bf16 %v157, %v157
    %v159 = vld [vmem:[#allocation5] sm:$0xf]
    %v160 = vld [vmem:[#allocation5 + $0x4] sm:$0xf]
    %v161 = vld [vmem:[#allocation5 + $0x8] sm:$0xf]
    %v162 = vld [vmem:[#allocation5 + $0xc] sm:$0xf]
    %v163 = vld [vmem:[#allocation5 + $0x10] sm:$0xf]
    %v164 = vld [vmem:[#allocation5 + $0x14] sm:$0xf]
    %v165 = vld [vmem:[#allocation5 + $0x18] sm:$0xf]
    %v166 = vld [vmem:[#allocation5 + $0x1c] sm:$0xf]
    %v167 = vld [vmem:[#allocation5 + $0x20] sm:$0xf]
    %v168 = vld [vmem:[#allocation5 + $0x24] sm:$0xf]
    %v169 = vld [vmem:[#allocation5 + $0x28] sm:$0xf]
    %v170 = vld [vmem:[#allocation5 + $0x2c] sm:$0xf]
    %v171 = vld [vmem:[#allocation5 + $0x30] sm:$0xf]
    %v172 = vld [vmem:[#allocation5 + $0x34] sm:$0xf]
    %v173 = vld [vmem:[#allocation5 + $0x38] sm:$0xf]
    %v174 = vld [vmem:[#allocation5 + $0x3c] sm:$0xf]
    %v175 = vld [vmem:[%s5] sm:$0x1]
    %v177 = vperm.slane %v175, 0
    %v195 = vunpack.c.l.b16 %v159
    %v196 = vunpack.c.l.b16 %v160
    %v197 = vunpack.c.l.b16 %v161
    %v198 = vunpack.c.l.b16 %v162
    %v199 = vunpack.c.l.b16 %v163
    %v200 = vunpack.c.l.b16 %v164
    %v201 = vunpack.c.l.b16 %v165
    %v202 = vunpack.c.l.b16 %v166
    %v203 = vunpack.c.l.b16 %v167
    %v204 = vunpack.c.l.b16 %v168
    %v205 = vunpack.c.l.b16 %v169
    %v206 = vunpack.c.l.b16 %v170
    %v207 = vunpack.c.l.b16 %v171
    %v208 = vunpack.c.l.b16 %v172
    %v209 = vunpack.c.l.b16 %v173
    %v210 = vunpack.c.l.b16 %v174
    %v211 = vpack.c.b16 %v196, %v195
    %v212 = vpack.c.b16 %v198, %v197
    %v213 = vpack.c.b16 %v200, %v199
    %v214 = vpack.c.b16 %v202, %v201
    %v215 = vpack.c.b16 %v204, %v203
    %v216 = vpack.c.b16 %v206, %v205
    %v217 = vpack.c.b16 %v208, %v207
    %v218 = vpack.c.b16 %v210, %v209
    %227 = vmatpush.bf16.msra.mxu0 %v218
    %228 = vmatpush.bf16.msra.mxu0 %v217
    %229 = vmatpush.bf16.msra.mxu0 %v216
    %230 = vmatpush.bf16.msra.mxu0 %v215
    %231 = vmatpush.bf16.msra.mxu0 %v214
    %232 = vmatpush.bf16.msra.mxu0 %v213
    %233 = vmatpush.bf16.msra.mxu0 %v212
    %234 = vmatpush.bf16.msra.mxu0 %v211
    %235 = vmatmul.bf16.gmra.mxu0 %v158
    %v236 = vpop.f32.mrf.mxu0
    %v237 = vadd.f32 %v177, %v236
    %v238 = vpop.f32.mrf.mxu0
    %239 = vdwg.mxu0
    %v240 = vmax.f32 %v237, 0.0
    %v241 = vpack.c.bf16 %v240, %v240
    %v242 = vld [vmem:[#allocation7] sm:$0xf]
    %v243 = vld [vmem:[#allocation7 + $0x4] sm:$0xf]
    %v244 = vld [vmem:[#allocation7 + $0x8] sm:$0xf]
    %v245 = vld [vmem:[#allocation7 + $0xc] sm:$0xf]
    %v246 = vld [vmem:[#allocation7 + $0x10] sm:$0xf]
    %v247 = vld [vmem:[#allocation7 + $0x14] sm:$0xf]
    %v248 = vld [vmem:[#allocation7 + $0x18] sm:$0xf]
    %v249 = vld [vmem:[#allocation7 + $0x1c] sm:$0xf]
    %v250 = vld [vmem:[#allocation7 + $0x20] sm:$0xf]
    %v251 = vld [vmem:[#allocation7 + $0x24] sm:$0xf]
    %v252 = vld [vmem:[#allocation7 + $0x28] sm:$0xf]
    %v253 = vld [vmem:[#allocation7 + $0x2c] sm:$0xf]
    %v254 = vld [vmem:[#allocation7 + $0x30] sm:$0xf]
    %v255 = vld [vmem:[#allocation7 + $0x34] sm:$0xf]
    %v256 = vld [vmem:[#allocation7 + $0x38] sm:$0xf]
    %v257 = vld [vmem:[#allocation7 + $0x3c] sm:$0xf]
    %v258 = vld [vmem:[%s6] sm:$0x1]
    %v260 = vperm.slane %v258, 0
    %v278 = vunpack.c.l.b16 %v242
    %v279 = vunpack.c.l.b16 %v243
    %v280 = vunpack.c.l.b16 %v244
    %v281 = vunpack.c.l.b16 %v245
    %v282 = vunpack.c.l.b16 %v246
    %v283 = vunpack.c.l.b16 %v247
    %v284 = vunpack.c.l.b16 %v248
    %v285 = vunpack.c.l.b16 %v249
    %v286 = vunpack.c.l.b16 %v250
    %v287 = vunpack.c.l.b16 %v251
    %v288 = vunpack.c.l.b16 %v252
    %v289 = vunpack.c.l.b16 %v253
    %v290 = vunpack.c.l.b16 %v254
    %v291 = vunpack.c.l.b16 %v255
    %v292 = vunpack.c.l.b16 %v256
    %v293 = vunpack.c.l.b16 %v257
    %v294 = vpack.c.b16 %v279, %v278
    %v295 = vpack.c.b16 %v281, %v280
    %v296 = vpack.c.b16 %v283, %v282
    %v297 = vpack.c.b16 %v285, %v284
    %v298 = vpack.c.b16 %v287, %v286
    %v299 = vpack.c.b16 %v289, %v288
    %v300 = vpack.c.b16 %v291, %v290
    %v301 = vpack.c.b16 %v293, %v292
    %310 = vmatpush.bf16.msra.mxu0 %v301
    %311 = vmatpush.bf16.msra.mxu0 %v300
    %312 = vmatpush.bf16.msra.mxu0 %v299
    %313 = vmatpush.bf16.msra.mxu0 %v298
    %314 = vmatpush.bf16.msra.mxu0 %v297
    %315 = vmatpush.bf16.msra.mxu0 %v296
    %316 = vmatpush.bf16.msra.mxu0 %v295
    %317 = vmatpush.bf16.msra.mxu0 %v294
    %318 = vmatmul.bf16.gmra.mxu0 %v241
    %v319 = vpop.f32.mrf.mxu0
    %v320 = vadd.f32 %v260, %v319
    %v321 = vpop.f32.mrf.mxu0
    %322 = vdwg.mxu0
    %323 = vst [vmem:[#allocation8] sm:$0xff] %v320
    // Predicated region
    $region42: #{ptdeep_forward.1} parent=1 // pred_check
      _
    $region43: #{ptdeep_forward.1} parent=1 // pred_check_branch
      %325 = sbr.rel (0) target = $region45
    $region44: #{ptdeep_forward.1} parent=1 // pred_region
      %327 = vsyncadd [#allocation4], 0
      %s329 = sshll.u32 [#allocation8], 4
      %s330 = int_to_ptr.vmem [resolvable:$true] %s329
      %s331 = sshll.u32 %s7, 4
      %s332 = int_to_ptr.hbm [resolvable:$true] %s331
      %334 = dma.vmem_to_hbm [thread:$0]  %s330, 128, %s332, [#allocation4]
    $region45: #{ptdeep_forward.1} parent=1 // pred_fallthru
      _
    // Predicated region
    $region46: #{ptdeep_forward.1} parent=1 // pred_check
      _
    $region47: #{ptdeep_forward.1} parent=1 // pred_check_branch
      %336 = sbr.rel (0) target = $region49
    $region48: #{ptdeep_forward.1} parent=1 // pred_region
      %338 = dma.done [#allocation4], 128
    $region49: #{ptdeep_forward.1} parent=1 // pred_fallthru
      _
    %339 = vsyncpa [#allocation3], 1
    %340 = vsyncpa [#allocation6], 1
    %341 = vsyncpa [#allocation4], 1

</llo_original>
